<compile_context>
chip_gen: v5e
topology: v5e:2x2
jax: 0.10.0
libtpu: 0.0.40
codegen_flags: <defaults>
</compile_context>

<pallas_src>
import functools

import jax
import jax.numpy as jnp
from jax.experimental import pallas as pl
from jax.experimental.pallas import tpu as pltpu

IN_EPS = 1e-5  # PyTorch InstanceNorm2d default eps (affine=False, no running stats)


def _round_up(x, m):
    return (x + m - 1) // m * m


def _pick_samples_per_block(n, per_sample_block_bytes, budget_bytes=8 << 20):
    """Largest divisor of n whose block fits the VMEM budget, keeping >= 2 grid steps
    (v7x has 2 TensorCores; a single grid step would serialize onto one core)."""
    best = 1
    for nb in range(1, n + 1):
        if n % nb:
            continue
        if n >= 2 and n // nb < 2:
            continue
        if nb * per_sample_block_bytes <= budget_bytes:
            best = nb
    return best


def _build_polyphase_weights(weight, bias, stride=2, padding=1):
    """Pack ConvTranspose2d weight (Cin, Cout, K, K) into polyphase form.

    Returns
      w_taps: (4, 4*Cout, Cin); tap index t = a*2 + b over the 2x2 input neighbourhood,
              row index p*Cout + co with output phase p = (oh%2)*2 + (ow%2).
      b2:     (4*Cout, 1) f32 bias replicated per phase.
    Identity: out[2i+ph, 2j+pw, co] = sum_{a,b,ci} w_taps[a*2+b, p*Cout+co, ci] * x[i+a, j+b, ci]
    (out-of-range reads are zero or masked in the kernel).
    """
    cin, cout, K, _ = weight.shape
    w_taps = jnp.zeros((4, 4 * cout, cin), dtype=jnp.float32)
    for ph in range(2):
        for pw in range(2):
            p = ph * 2 + pw
            for a in range(2):
                for b in range(2):
                    kh = ph - stride * a + padding
                    kw = pw - stride * b + padding
                    if 0 <= kh < K and 0 <= kw < K:
                        t = a * 2 + b
                        blk = weight[:, :, kh, kw].T.astype(jnp.float32)   # (Cout, Cin)
                        w_taps = w_taps.at[t, p * cout:(p + 1) * cout, :].set(blk)
    b2 = jnp.tile(bias.astype(jnp.float32).reshape(1, -1), (4, 1)).reshape(4 * cout, 1)
    return w_taps, b2


def _make_kernel(nb, cout, H, W, HWp):
    HW = H * W
    Ho, Wo = 2 * H - 1, 2 * W - 1
    inv_count = 1.0 / float(Ho * Wo)
    tap_off = (0, 1, W, W + 1)  # tap (a, b) -> flat offset a*W + b

    def kernel(x_ref, w_ref, b_ref, o_ref):
        # x_ref: (nb, Cin, L)  w_ref: (4, 4*Cout, Cin)  b_ref: (4*Cout, 1)
        # o_ref: (nb, 4*Cout, HWp); rows = phase*Cout + co, lanes = i*W + j.
        # Per-phase lane-validity masks (phase tails + lane padding), hoisted out of
        # the per-sample loop (JAX does not CSE broadcasts inside loops).
        q = jax.lax.broadcasted_iota(jnp.int32, (1, HWp), 1)
        col_ok = ((q % W) < (W - 1)).astype(jnp.float32)
        m_ee = (q < HW).astype(jnp.float32)
        m_oe = (q < (H - 1) * W).astype(jnp.float32)
        m_eo = m_ee * col_ok
        m_oo = m_oe * col_ok
        mask3 = jnp.stack([m_ee, m_eo, m_oe, m_oo], axis=0)          # (4, 1, HWp)

        bias2 = b_ref[...]                                           # (4*Cout, 1) f32

        def per_sample(i):
            xi = x_ref[i]                                            # (Cin, L)
            # Polyphase deconv: 4 accumulated tap matmuls against shifted views of the
            # raw input, built in VMEM (nothing materialized in HBM).
            acc = jnp.dot(w_ref[0], xi[:, 0:HWp],
                          preferred_element_type=jnp.float32)        # (4*Cout, HWp) f32
            for t in range(1, 4):
                off = tap_off[t]
                acc = acc + jnp.dot(w_ref[t], xi[:, off:off + HWp],
                                    preferred_element_type=jnp.float32)
            acc = acc + bias2

            # Fused InstanceNorm2d over the VALID output positions only (masked stats).
            # (If the lane reductions ever bind on XLU, they could be moved to the
            #  idle MXU via `masked_acc @ ones((HWp, 1))`.)
            acc3 = acc.reshape(4, cout, HWp)
            accm = acc3 * mask3
            s1 = jnp.sum(accm, axis=(0, 2), keepdims=True)           # (1, Cout, 1)
            s2 = jnp.sum(accm * accm, axis=(0, 2), keepdims=True)
            mean = s1 * inv_count
            var = jnp.maximum(s2 * inv_count - mean * mean, 0.0)
            out = (acc3 - mean) * jax.lax.rsqrt(var + IN_EPS)
            o_ref[i] = out.reshape(4 * cout, HWp).astype(o_ref.dtype)

        if nb == 1:
            per_sample(0)
        else:
            def body(i, carry):
                per_sample(i)
                return carry
            jax.lax.fori_loop(0, nb, body, 0, unroll=True)

    return kernel


def upscale_dconv_forward(x, weight, bias, *, kernel_size=3, stride=2, padding=1,
                          samples_per_block=None, use_bf16_matmul=True):
    """x: (N, Cin, H, W).  weight: (Cin, Cout, K, K) (ConvTranspose2d layout).  bias: (Cout,).
    Returns ConvTranspose2d(x) -> InstanceNorm2d, shape (N, Cout, Ho, Wo)."""
    N, Cin, H, W = x.shape
    wCin, Cout, K, K2 = weight.shape
    assert wCin == Cin and K == K2 == kernel_size
    # TODO(synk): the polyphase packing is specialised to the module defaults
    # (kernel=3, stride=2, padding=1); other configs need a generalised tap/phase pack.
    assert (kernel_size, stride, padding) == (3, 2, 1), "specialised to module defaults"

    Ho = (H - 1) * stride - 2 * padding + kernel_size    # = 2H - 1
    Wo = (W - 1) * stride - 2 * padding + kernel_size    # = 2W - 1
    HW = H * W
    HWp = _round_up(HW, 128)                 # lane-dense matmul / store width
    L = _round_up(HWp + W + 1, 128)          # per-sample length incl. zero tail for tap shifts
    P = 4                                    # output phases (= stride**2) = tap count

    in_dtype = jnp.bfloat16 if use_bf16_matmul else jnp.float32
    out_dtype = x.dtype

    # --- wrapper-side prep: input-sized only (no im2col / dilated tensor) ---
    xf = x.reshape(N, Cin, HW).astype(in_dtype)
    xf = jnp.pad(xf, ((0, 0), (0, 0), (0, L - HW)))
    w_taps, b2 = _build_polyphase_weights(weight, bias, stride=stride, padding=padding)
    w_taps = w_taps.astype(in_dtype)

    # --- block / grid selection ---
    itm = jnp.dtype(in_dtype).itemsize
    per_sample_bytes = Cin * L * itm + P * Cout * HWp * (4 + jnp.dtype(out_dtype).itemsize)
    if samples_per_block is None:
        nb = _pick_samples_per_block(N, per_sample_bytes)
    else:
        nb = min(samples_per_block, N)
    assert N % nb == 0, "samples_per_block must divide the batch"
    grid = (N // nb,)

    # VMEM limit derived from the actual (double-buffered) blocks, capped at 48 MiB
    # (v7x only has 64 MiB per TensorCore; never request all of it).
    block_bytes = nb * per_sample_bytes + w_taps.size * itm + b2.size * 4
    vmem_limit = int(min(48 << 20, max(16 << 20, 4 * block_bytes + (2 << 20))))

    kernel = _make_kernel(nb, Cout, H, W, HWp)

    # TODO(synk): for very large Cin*H*W add an HW-tile grid axis ("arbitrary", last)
    # with streamed s1/s2 scratch and a finalize pass; not needed at these sizes since
    # only the raw input (not an im2col expansion) is staged in VMEM.
    out = pl.pallas_call(
        kernel,
        out_shape=jax.ShapeDtypeStruct((N, P * Cout, HWp), out_dtype),
        grid_spec=pltpu.PrefetchScalarGridSpec(
            num_scalar_prefetch=0,
            grid=grid,
            in_specs=[
                pl.BlockSpec((nb, Cin, L), lambda n: (n, 0, 0)),
                pl.BlockSpec((P, P * Cout, Cin), lambda n: (0, 0, 0)),  # resident
                pl.BlockSpec((P * Cout, 1), lambda n: (0, 0)),          # resident
            ],
            out_specs=pl.BlockSpec((nb, P * Cout, HWp), lambda n: (n, 0, 0)),
        ),
        compiler_params=pltpu.CompilerParams(
            dimension_semantics=("parallel",),
            vmem_limit_bytes=vmem_limit,
        ),
    )(xf, w_taps, b2)

    # Un-interleave the 4 phases into NCHW (output-sized shuffle only, done by XLA).
    out = out[:, :, :HW].reshape(N, 2, 2, Cout, H, W)
    out = out.transpose(0, 3, 4, 1, 5, 2).reshape(N, Cout, 2 * H, 2 * W)
    return out[:, :, :Ho, :Wo]


def _reference(x, weight, bias, *, stride=2, padding=1):
    """Pure-JAX reference: ConvTranspose2d + bias + InstanceNorm2d."""
    K = weight.shape[-1]
    pe = K - 1 - padding
    w_conv = jnp.flip(weight, axis=(2, 3)).transpose(1, 0, 2, 3)      # (Cout, Cin, K, K)
    out = jax.lax.conv_general_dilated(
        x, w_conv, window_strides=(1, 1),
        padding=((pe, pe), (pe, pe)),
        lhs_dilation=(stride, stride),
        dimension_numbers=("NCHW", "OIHW", "NCHW"),
    ) + bias[None, :, None, None]
    mean = jnp.mean(out, axis=(2, 3), keepdims=True)
    var = jnp.mean((out - mean) ** 2, axis=(2, 3), keepdims=True)
    return (out - mean) * jax.lax.rsqrt(var + IN_EPS)


if __name__ == "__main__":
    key = jax.random.PRNGKey(0)
    k_x, k_w, k_b, k_x2 = jax.random.split(key, 4)

    N, Cin, H, W = 2, 4, 16, 16
    Cout, K, stride, padding = 8, 3, 2, 1

    x = jax.random.normal(k_x, (N, Cin, H, W), dtype=jnp.float32)
    fan_in = Cin * K * K
    bound = 1.0 / (fan_in ** 0.5)
    # ConvTranspose2d weight layout: (in_channels, out_channels, K, K)
    weight = jax.random.uniform(k_w, (Cin, Cout, K, K), jnp.float32, -bound, bound)
    bias = jax.random.uniform(k_b, (Cout,), jnp.float32, -bound, bound)

    Ho = (H - 1) * stride - 2 * padding + K
    Wo = (W - 1) * stride - 2 * padding + K
    ref = _reference(x, weight, bias, stride=stride, padding=padding)

    # Default perf path: bf16 MXU operands, f32 accumulation / norm stats.
    fwd_bf16 = jax.jit(functools.partial(upscale_dconv_forward,
                                         kernel_size=K, stride=stride, padding=padding))
    out = jax.block_until_ready(fwd_bf16(x, weight, bias))
    assert out.shape == (N, Cout, Ho, Wo)
    assert jnp.allclose(out, ref, atol=1e-1, rtol=1e-1), "bf16 path mismatch vs reference"

    # Full-f32 path: tight tolerance vs the XLA reference.
    fwd_f32 = jax.jit(functools.partial(upscale_dconv_forward, kernel_size=K,
                                        stride=stride, padding=padding,
                                        use_bf16_matmul=False))
    out_f32 = jax.block_until_ready(fwd_f32(x, weight, bias))
    assert jnp.allclose(out_f32, ref, atol=1e-4, rtol=1e-4), "f32 path mismatch vs reference"

    # Multi-sample block path (2 samples per grid step, grid still >= 2 for v7x megacore).
    x4 = jax.random.normal(k_x2, (4, Cin, H, W), dtype=jnp.float32)
    ref4 = _reference(x4, weight, bias, stride=stride, padding=padding)
    fwd_blk = jax.jit(functools.partial(upscale_dconv_forward, kernel_size=K,
                                        stride=stride, padding=padding,
                                        samples_per_block=2, use_bf16_matmul=False))
    out4 = jax.block_until_ready(fwd_blk(x4, weight, bias))
    assert out4.shape == (4, Cout, Ho, Wo)
    assert jnp.allclose(out4, ref4, atol=1e-4, rtol=1e-4), "blocked path mismatch vs reference"

    print("KERNEL_OK")
</pallas_src>

<mosaic_0001>
module attributes {stable_mosaic.version = 11 : i64} {
  func.func @kernel(%arg0: i32, %arg1: memref<1x4x384xbf16, #tpu.memory_space<vmem>>, %arg2: memref<4x32x4xbf16, #tpu.memory_space<vmem>>, %arg3: memref<32x1xf32, #tpu.memory_space<vmem>>, %arg4: memref<1x32x256xf32, #tpu.memory_space<vmem>>) attributes {dimension_semantics = [#tpu.dimension_semantics<parallel>], iteration_bounds = array<i64: 2>, scalar_prefetch = 0 : i64, scratch_operands = 0 : i64, tpu.core_type = #tpu.core_type<tc>, window_params = [{transform_indices = @transform_0, window_bounds = array<i64: 1, 4, 384>}, {pipeline_mode = #tpu.pipeline_mode<synchronous>, transform_indices = @transform_1, window_bounds = array<i64: 4, 32, 4>}, {pipeline_mode = #tpu.pipeline_mode<synchronous>, transform_indices = @transform_2, window_bounds = array<i64: 32, 1>}, {transform_indices = @transform_3, window_bounds = array<i64: 1, 32, 256>}]} {
    %0 = tpu.iota {dimensions = array<i32: 1>} : vector<1x256xi32>
    %c16_i32 = arith.constant 16 : i32
    %c0_i32 = arith.constant 0 : i32
    %1 = arith.cmpi eq, %c16_i32, %c0_i32 : i32
    %c1_i32 = arith.constant 1 : i32
    %2 = arith.select %1, %c1_i32, %c16_i32 : i32
    %3 = vector.broadcast %2 : i32 to vector<1x256xi32>
    %4 = arith.remsi %0, %3 : vector<1x256xi32>
    %c0_i32_0 = arith.constant 0 : i32
    %5 = vector.broadcast %c0_i32_0 : i32 to vector<1x256xi32>
    %6 = arith.cmpi ne, %4, %5 : vector<1x256xi32>
    %c0_i32_1 = arith.constant 0 : i32
    %7 = vector.broadcast %c0_i32_1 : i32 to vector<1x256xi32>
    %8 = arith.cmpi slt, %4, %7 : vector<1x256xi32>
    %c0_i32_2 = arith.constant 0 : i32
    %9 = arith.cmpi slt, %2, %c0_i32_2 : i32
    %10 = vector.broadcast %9 : i1 to vector<1x256xi1>
    %11 = vector.broadcast %10 : vector<1x256xi1> to vector<1x256xi1>
    %12 = arith.xori %8, %11 : vector<1x256xi1>
    %13 = arith.andi %12, %6 : vector<1x256xi1>
    %14 = vector.broadcast %2 : i32 to vector<1x256xi32>
    %15 = arith.addi %4, %14 : vector<1x256xi32>
    %16 = arith.select %13, %15, %4 : vector<1x256xi1>, vector<1x256xi32>
    %c15_i32 = arith.constant 15 : i32
    %17 = vector.broadcast %c15_i32 : i32 to vector<1x256xi32>
    %18 = arith.cmpi slt, %16, %17 : vector<1x256xi32>
    %19 = arith.extui %18 : vector<1x256xi1> to vector<1x256xi32>
    %20 = arith.sitofp %19 : vector<1x256xi32> to vector<1x256xf32>
    %c256_i32 = arith.constant 256 : i32
    %21 = vector.broadcast %c256_i32 : i32 to vector<1x256xi32>
    %22 = arith.cmpi slt, %0, %21 : vector<1x256xi32>
    %23 = arith.extui %22 : vector<1x256xi1> to vector<1x256xi32>
    %24 = arith.sitofp %23 : vector<1x256xi32> to vector<1x256xf32>
    %c240_i32 = arith.constant 240 : i32
    %25 = vector.broadcast %c240_i32 : i32 to vector<1x256xi32>
    %26 = arith.cmpi slt, %0, %25 : vector<1x256xi32>
    %27 = arith.extui %26 : vector<1x256xi1> to vector<1x256xi32>
    %28 = arith.sitofp %27 : vector<1x256xi32> to vector<1x256xf32>
    %29 = arith.mulf %24, %20 : vector<1x256xf32>
    %30 = arith.mulf %28, %20 : vector<1x256xf32>
    %31 = vector.shape_cast %24 : vector<1x256xf32> to vector<1x1x256xf32>
    %32 = vector.shape_cast %29 : vector<1x256xf32> to vector<1x1x256xf32>
    %33 = vector.shape_cast %28 : vector<1x256xf32> to vector<1x1x256xf32>
    %34 = vector.shape_cast %30 : vector<1x256xf32> to vector<1x1x256xf32>
    %35 = tpu.concatenate %31, %32, %33, %34 in 0 : vector<1x1x256xf32>, vector<1x1x256xf32>, vector<1x1x256xf32>, vector<1x1x256xf32> -> vector<4x1x256xf32>
    %c0 = arith.constant 0 : index
    %c0_3 = arith.constant 0 : index
    %36 = vector.load %arg3[%c0, %c0_3] : memref<32x1xf32, #tpu.memory_space<vmem>>, vector<32x1xf32>
    %c0_4 = arith.constant 0 : index
    %c0_5 = arith.constant 0 : index
    %c0_6 = arith.constant 0 : index
    %37 = vector.load %arg1[%c0_4, %c0_5, %c0_6] : memref<1x4x384xbf16, #tpu.memory_space<vmem>>, vector<1x4x384xbf16>
    %38 = vector.shape_cast %37 : vector<1x4x384xbf16> to vector<4x384xbf16>
    %c0_7 = arith.constant 0 : index
    %c0_8 = arith.constant 0 : index
    %c0_9 = arith.constant 0 : index
    %39 = vector.load %arg2[%c0_7, %c0_8, %c0_9] : memref<4x32x4xbf16, #tpu.memory_space<vmem>>, vector<1x32x4xbf16>
    %40 = vector.shape_cast %39 : vector<1x32x4xbf16> to vector<32x4xbf16>
    %41 = vector.extract_strided_slice %38 {offsets = [0, 0], sizes = [4, 256], strides = [1, 1]} : vector<4x384xbf16> to vector<4x256xbf16>
    %cst = arith.constant dense<0.000000e+00> : vector<32x256xf32>
    %42 = tpu.matmul %40, %41, %cst {dimension_numbers = #tpu.dot_dimension_numbers<[1], [0], [0], [1], [0, 0, 1, 1], [], []>} : vector<32x4xbf16>, vector<4x256xbf16>, vector<32x256xf32> -> vector<32x256xf32>
    %c1 = arith.constant 1 : index
    %c0_10 = arith.constant 0 : index
    %c0_11 = arith.constant 0 : index
    %43 = vector.load %arg2[%c1, %c0_10, %c0_11] : memref<4x32x4xbf16, #tpu.memory_space<vmem>>, vector<1x32x4xbf16>
    %44 = vector.shape_cast %43 : vector<1x32x4xbf16> to vector<32x4xbf16>
    %45 = vector.extract_strided_slice %38 {offsets = [0, 1], sizes = [4, 256], strides = [1, 1]} : vector<4x384xbf16> to vector<4x256xbf16>
    %cst_12 = arith.constant dense<0.000000e+00> : vector<32x256xf32>
    %46 = tpu.matmul %44, %45, %cst_12 {dimension_numbers = #tpu.dot_dimension_numbers<[1], [0], [0], [1], [0, 0, 1, 1], [], []>} : vector<32x4xbf16>, vector<4x256xbf16>, vector<32x256xf32> -> vector<32x256xf32>
    %47 = arith.addf %42, %46 : vector<32x256xf32>
    %c2 = arith.constant 2 : index
    %c0_13 = arith.constant 0 : index
    %c0_14 = arith.constant 0 : index
    %48 = vector.load %arg2[%c2, %c0_13, %c0_14] : memref<4x32x4xbf16, #tpu.memory_space<vmem>>, vector<1x32x4xbf16>
    %49 = vector.shape_cast %48 : vector<1x32x4xbf16> to vector<32x4xbf16>
    %50 = vector.extract_strided_slice %38 {offsets = [0, 16], sizes = [4, 256], strides = [1, 1]} : vector<4x384xbf16> to vector<4x256xbf16>
    %cst_15 = arith.constant dense<0.000000e+00> : vector<32x256xf32>
    %51 = tpu.matmul %49, %50, %cst_15 {dimension_numbers = #tpu.dot_dimension_numbers<[1], [0], [0], [1], [0, 0, 1, 1], [], []>} : vector<32x4xbf16>, vector<4x256xbf16>, vector<32x256xf32> -> vector<32x256xf32>
    %52 = arith.addf %47, %51 : vector<32x256xf32>
    %c3 = arith.constant 3 : index
    %c0_16 = arith.constant 0 : index
    %c0_17 = arith.constant 0 : index
    %53 = vector.load %arg2[%c3, %c0_16, %c0_17] : memref<4x32x4xbf16, #tpu.memory_space<vmem>>, vector<1x32x4xbf16>
    %54 = vector.shape_cast %53 : vector<1x32x4xbf16> to vector<32x4xbf16>
    %55 = vector.extract_strided_slice %38 {offsets = [0, 17], sizes = [4, 256], strides = [1, 1]} : vector<4x384xbf16> to vector<4x256xbf16>
    %cst_18 = arith.constant dense<0.000000e+00> : vector<32x256xf32>
    %56 = tpu.matmul %54, %55, %cst_18 {dimension_numbers = #tpu.dot_dimension_numbers<[1], [0], [0], [1], [0, 0, 1, 1], [], []>} : vector<32x4xbf16>, vector<4x256xbf16>, vector<32x256xf32> -> vector<32x256xf32>
    %57 = arith.addf %52, %56 : vector<32x256xf32>
    %58 = vector.broadcast %36 : vector<32x1xf32> to vector<32x256xf32>
    %59 = arith.addf %57, %58 : vector<32x256xf32>
    %60 = vector.shape_cast %59 : vector<32x256xf32> to vector<4x8x256xf32>
    %61 = vector.broadcast %35 : vector<4x1x256xf32> to vector<4x8x256xf32>
    %62 = arith.mulf %60, %61 : vector<4x8x256xf32>
    %cst_19 = arith.constant dense<0.000000e+00> : vector<8xf32>
    %63 = vector.multi_reduction <add>, %62, %cst_19 [0, 2] : vector<4x8x256xf32> to vector<8xf32>
    %64 = vector.shape_cast %63 : vector<8xf32> to vector<1x8x1xf32>
    %65 = arith.mulf %62, %62 : vector<4x8x256xf32>
    %cst_20 = arith.constant dense<0.000000e+00> : vector<8xf32>
    %66 = vector.multi_reduction <add>, %65, %cst_20 [0, 2] : vector<4x8x256xf32> to vector<8xf32>
    %67 = vector.shape_cast %66 : vector<8xf32> to vector<1x8x1xf32>
    %cst_21 = arith.constant 0.00104058278 : f32
    %68 = vector.broadcast %cst_21 : f32 to vector<1x8x1xf32>
    %69 = arith.mulf %64, %68 : vector<1x8x1xf32>
    %cst_22 = arith.constant 0.00104058278 : f32
    %70 = vector.broadcast %cst_22 : f32 to vector<1x8x1xf32>
    %71 = arith.mulf %67, %70 : vector<1x8x1xf32>
    %72 = arith.mulf %69, %69 : vector<1x8x1xf32>
    %73 = arith.subf %71, %72 : vector<1x8x1xf32>
    %cst_23 = arith.constant 0.000000e+00 : f32
    %74 = vector.broadcast %cst_23 : f32 to vector<1x8x1xf32>
    %75 = arith.maximumf %73, %74 : vector<1x8x1xf32>
    %76 = vector.broadcast %69 : vector<1x8x1xf32> to vector<4x8x256xf32>
    %77 = arith.subf %60, %76 : vector<4x8x256xf32>
    %cst_24 = arith.constant 9.99999974E-6 : f32
    %78 = vector.broadcast %cst_24 : f32 to vector<1x8x1xf32>
    %79 = arith.addf %75, %78 : vector<1x8x1xf32>
    %80 = math.rsqrt %79 : vector<1x8x1xf32>
    %81 = vector.broadcast %80 : vector<1x8x1xf32> to vector<4x8x256xf32>
    %82 = arith.mulf %77, %81 : vector<4x8x256xf32>
    %83 = vector.shape_cast %82 : vector<4x8x256xf32> to vector<32x256xf32>
    %c0_25 = arith.constant 0 : index
    %c0_26 = arith.constant 0 : index
    %c0_27 = arith.constant 0 : index
    %84 = vector.load %arg4[%c0_25, %c0_26, %c0_27] : memref<1x32x256xf32, #tpu.memory_space<vmem>>, vector<1x32x256xf32>
    %85 = vector.shape_cast %84 : vector<1x32x256xf32> to vector<32x256xf32>
    %86 = vector.shape_cast %83 : vector<32x256xf32> to vector<1x32x256xf32>
    tpu.vector_store %arg4[%c0_25, %c0_26, %c0_27], %86 {strides = array<i32>} : memref<1x32x256xf32, #tpu.memory_space<vmem>>, vector<1x32x256xf32>,
    return
  }
  func.func @transform_0(%arg0: i32) -> (i32, i32, i32) {
    %c0_i32 = arith.constant 0 : i32
    %c0_i32_0 = arith.constant 0 : i32
    %c0_i32_1 = arith.constant 0 : i32
    return %arg0, %c0_i32, %c0_i32_0 : i32, i32, i32
  }
  func.func @transform_1(%arg0: i32) -> (i32, i32, i32) {
    %c0_i32 = arith.constant 0 : i32
    %c0_i32_0 = arith.constant 0 : i32
    %c0_i32_1 = arith.constant 0 : i32
    %c0_i32_2 = arith.constant 0 : i32
    return %c0_i32, %c0_i32_0, %c0_i32_1 : i32, i32, i32
  }
  func.func @transform_2(%arg0: i32) -> (i32, i32) {
    %c0_i32 = arith.constant 0 : i32
    %c0_i32_0 = arith.constant 0 : i32
    %c0_i32_1 = arith.constant 0 : i32
    return %c0_i32, %c0_i32_0 : i32, i32
  }
  func.func @transform_3(%arg0: i32) -> (i32, i32, i32) {
    %c0_i32 = arith.constant 0 : i32
    %c0_i32_0 = arith.constant 0 : i32
    %c0_i32_1 = arith.constant 0 : i32
    return %arg0, %c0_i32, %c0_i32_0 : i32, i32, i32
  }
}

</mosaic_0001>

<llo_original>
// kernel: tile.6
$region0: #{tile.6}
  #allocation0 [shape = 's32[1]{0}', space=sflag, size = 0x4, scoped, tag = 'scoped memory for tile.6']
  %s0 = inlined_call_operand.vmem [shape: f32[8], index: 0, kind: input, shape index: {}]
  %s1 = inlined_call_operand.vmem [shape: f32[4,1,1,8], index: 1, kind: output, shape index: {}]
  // Predicated region
  $region2: #{tile.6} parent=0 // pred_check
    _
  $region3: #{tile.6} parent=0 // pred_check_branch
    %3 = sbr.rel (0) target = $region5
  $region4: #{tile.6} parent=0 // pred_region
    _
  $region5: #{tile.6} parent=0 // pred_fallthru
    _
  %v4 = vld [vmem:[%s0] ss:$0 sm:$0xff]
  %5 = vst [vmem:[%s1] sm:$0xf] %v4

// kernel: tile.0
$region0: #{tile.0}
  %s0 = inlined_call_operand.vmem [shape: f32[4,1,1,8], index: 0, kind: input, shape index: {}]
  %s1 = inlined_call_operand.vmem [shape: f32[32,1], index: 1, kind: output, shape index: {}]
  $region1: #{tile.0} parent=0
    #allocation0 [shape = 'u8[4096]{0}', space=vmem, size = 0x1000, scoped, tag = 'scoped mem for input reshape']
    %s3 = ssub.s32 16, 1
    %v4 = vld [vmem:[%s0] sm:%s3]
    %5 = vst [vmem:[#allocation0] sm:%s3] %v4
    %v6 = vld [vmem:[#allocation0] sm:$0xf]
    %vm7 = vcmask 7168
    %8 = vst.msk [vmem:[%s1] ss:$8 sm:$0xf] %vm7, %v6
    %v9 = vld [vmem:[#allocation0] sm:$0xf]
    %10 = vrot.lane.b32.xlu0 %v9, 127
    %v11 = vpop.permute.xlu0 %10
    %vm12 = vcmask 7168
    %s13 = scalar_lea.vmem %s1, 1
    %14 = vst.msk [vmem:[%s13] ss:$8 sm:$0xf] %vm12, %v11
    %v15 = vld [vmem:[#allocation0] sm:$0xf]
    %16 = vrot.lane.b32.xlu0 %v15, 126
    %v17 = vpop.permute.xlu0 %16
    %vm18 = vcmask 7168
    %s19 = scalar_lea.vmem %s1, 2
    %20 = vst.msk [vmem:[%s19] ss:$8 sm:$0xf] %vm18, %v17
    %v21 = vld [vmem:[#allocation0] sm:$0xf]
    %22 = vrot.lane.b32.xlu0 %v21, 125
    %v23 = vpop.permute.xlu0 %22
    %vm24 = vcmask 7168
    %s25 = scalar_lea.vmem %s1, 3
    %26 = vst.msk [vmem:[%s25] ss:$8 sm:$0xf] %vm24, %v23
    %v27 = vld [vmem:[#allocation0] sm:$0xf]
    %28 = vrot.lane.b32.xlu0 %v27, 124
    %v29 = vpop.permute.xlu0 %28
    %vm30 = vcmask 7168
    %s31 = scalar_lea.vmem %s1, 4
    %32 = vst.msk [vmem:[%s31] ss:$8 sm:$0xf] %vm30, %v29
    %v33 = vld [vmem:[#allocation0] sm:$0xf]
    %34 = vrot.lane.b32.xlu0 %v33, 123
    %v35 = vpop.permute.xlu0 %34
    %vm36 = vcmask 7168
    %s37 = scalar_lea.vmem %s1, 5
    %38 = vst.msk [vmem:[%s37] ss:$8 sm:$0xf] %vm36, %v35
    %v39 = vld [vmem:[#allocation0] sm:$0xf]
    %40 = vrot.lane.b32.xlu0 %v39, 122
    %v41 = vpop.permute.xlu0 %40
    %vm42 = vcmask 7168
    %s43 = scalar_lea.vmem %s1, 6
    %44 = vst.msk [vmem:[%s43] ss:$8 sm:$0xf] %vm42, %v41
    %v45 = vld [vmem:[#allocation0] sm:$0xf]
    %46 = vrot.lane.b32.xlu0 %v45, 121
    %v47 = vpop.permute.xlu0 %46
    %vm48 = vcmask 7168
    %s49 = scalar_lea.vmem %s1, 7
    %50 = vst.msk [vmem:[%s49] ss:$8 sm:$0xf] %vm48, %v47

// kernel: upscale_dconv_forward.1
$region0: #{upscale_dconv_forward.1}
  #allocation0 [shape = 'u32[]', space=smem, size = 0x4, offset = 0x4, fixed_abs, tag = 'smem constant byte address 0x4 - core index']
  #allocation1 [shape = 'u32[72,128]{1,0:T(1,128)}', space=vmem, size = 0x9000, scoped, tag = 'internal scratch']
  %s0 = inlined_call_operand.vmem [shape: bf16[2,4,384], index: 0, kind: input, shape index: {}]
  %s1 = inlined_call_operand.vmem [shape: bf16[4,32,4], index: 1, kind: input, shape index: {}]
  %s2 = inlined_call_operand.vmem [shape: f32[32,1], index: 2, kind: input, shape index: {}]
  %s3 = inlined_call_operand.vmem [shape: f32[2,32,256], index: 3, kind: output, shape index: {}]
  %s4 = sld [smem:[#allocation0]]
  $region45: #{upscale_dconv_forward.1} parent=0
    _
  %s6 = ssub.s32 1, %s4
  %s7 = scalar_select 0, %s6, %s4
  loop: start=0, step=1, limit=4
  $region2: #{upscale_dconv_forward.1} parent=0 // loop_pre_header
    _
  $region3: #{upscale_dconv_forward.1} parent=0 // loop_header
    %s9 = sphi 0, %s13
    %p10 = scmp.ge.s32.totalorder %s9, 4
    %s19 = sphi 0, %s21
    %s22 = sphi 0, %s19
    %s23 = sphi 0, %s22
    %s39 = sphi 0, %s23
    %s43 = sphi 0, %s43
    %s45 = sphi 0, %s43
    %s46 = sphi 0, %s45
    %s60 = sphi 0, %s46
    %s64 = sphi 0, %s64
    %s66 = sphi 0, %s64
    %s67 = sphi 0, %s66
    %s81 = sphi 0, %s67
    %s87 = sphi 0, %s89
    %s90 = sphi 0, %s87
    %s91 = sphi 0, %s90
    %s107 = sphi 0, %s91
  $region4: #{upscale_dconv_forward.1} parent=0 // loop_header_branch
    %12 = sbr.rel (%p10) target = $region8
  $region5: #{upscale_dconv_forward.1} parent=0 // loop_body
    %s14 = ssub.s32 %s9, 1
    %s15 = ssub.s32 %s9, 2
    %s16 = sadd.s32 %s9, 1
    %s17 = ssub.s32 %s9, %s16
    %p18 = scmp.eq.s32.totalorder %s17, 0
    %s20 = sadd.s32 %s19, 1
    %s21 = scalar_select %p18, %s19, %s20
    %p24 = pneg %p18
    %p25 = scmp.eq.s32.totalorder %s9, 1
    %p26 = por %p24, %p25
    %p27 = scmp.ne.s32.totalorder %s19, %s22
    %p28 = scmp.eq.s32.totalorder %s9, 0
    %p29 = por %p27, %p28
    %p30 = scmp.ne.s32.totalorder %s19, %s22
    %p31 = scmp.eq.s32.totalorder %s14, 1
    %p32 = por %p30, %p31
    %p33 = scmp.ne.s32.totalorder %s22, %s23
    %p34 = scmp.eq.s32.totalorder %s14, 0
    %p35 = por %p33, %p34
    %p36 = scmp.ne.s32.totalorder %s22, %s23
    %p37 = scmp.eq.s32.totalorder %s15, 1
    %p38 = por %p36, %p37
    %p40 = scmp.ne.s32.totalorder %s23, %s39
    %p41 = scmp.eq.s32.totalorder %s15, 0
    %p42 = por %p40, %p41
    %s44 = sadd.s32 %s43, 1
    %p47 = scmp.eq.s32.totalorder %s9, 1
    %p48 = scmp.ne.s32.totalorder %s43, %s45
    %p49 = scmp.eq.s32.totalorder %s9, 0
    %p50 = por %p48, %p49
    %p51 = scmp.ne.s32.totalorder %s43, %s45
    %p52 = scmp.eq.s32.totalorder %s14, 1
    %p53 = por %p51, %p52
    %p54 = scmp.ne.s32.totalorder %s45, %s46
    %p55 = scmp.eq.s32.totalorder %s14, 0
    %p56 = por %p54, %p55
    %p57 = scmp.ne.s32.totalorder %s45, %s46
    %p58 = scmp.eq.s32.totalorder %s15, 1
    %p59 = por %p57, %p58
    %p61 = scmp.ne.s32.totalorder %s46, %s60
    %p62 = scmp.eq.s32.totalorder %s15, 0
    %p63 = por %p61, %p62
    %s65 = sadd.s32 %s64, 1
    %p68 = scmp.eq.s32.totalorder %s9, 1
    %p69 = scmp.ne.s32.totalorder %s64, %s66
    %p70 = scmp.eq.s32.totalorder %s9, 0
    %p71 = por %p69, %p70
    %p72 = scmp.ne.s32.totalorder %s64, %s66
    %p73 = scmp.eq.s32.totalorder %s14, 1
    %p74 = por %p72, %p73
    %p75 = scmp.ne.s32.totalorder %s66, %s67
    %p76 = scmp.eq.s32.totalorder %s14, 0
    %p77 = por %p75, %p76
    %p78 = scmp.ne.s32.totalorder %s66, %s67
    %p79 = scmp.eq.s32.totalorder %s15, 1
    %p80 = por %p78, %p79
    %p82 = scmp.ne.s32.totalorder %s67, %s81
    %p83 = scmp.eq.s32.totalorder %s15, 0
    %p84 = por %p82, %p83
    %s85 = ssub.s32 %s9, %s16
    %p86 = scmp.eq.s32.totalorder %s85, 0
    %s88 = sadd.s32 %s87, 1
    %s89 = scalar_select %p86, %s87, %s88
    %p92 = pneg %p86
    %p93 = scmp.eq.s32.totalorder %s9, 1
    %p94 = por %p92, %p93
    %p95 = scmp.ne.s32.totalorder %s87, %s90
    %p96 = scmp.eq.s32.totalorder %s9, 0
    %p97 = por %p95, %p96
    %p98 = scmp.ne.s32.totalorder %s87, %s90
    %p99 = scmp.eq.s32.totalorder %s14, 1
    %p100 = por %p98, %p99
    %p101 = scmp.ne.s32.totalorder %s90, %s91
    %p102 = scmp.eq.s32.totalorder %s14, 0
    %p103 = por %p101, %p102
    %p104 = scmp.ne.s32.totalorder %s90, %s91
    %p105 = scmp.eq.s32.totalorder %s15, 1
    %p106 = por %p104, %p105
    %p108 = scmp.ne.s32.totalorder %s91, %s107
    %p109 = scmp.eq.s32.totalorder %s15, 0
    %p110 = por %p108, %p109
    %p111 = scmp.le.s32.totalorder 1, %s9
    %p112 = scmp.lt.s32.totalorder %s9, 3
    %p113 = pnand %p111, %p112
    %p114 = pneg %p113
    // Predicated region
    $region9: #{upscale_dconv_forward.1} parent=5 // pred_check
      _
    $region10: #{upscale_dconv_forward.1} parent=5 // pred_check_branch
      %116 = sbr.rel (%p113) target = $region12
    $region11: #{upscale_dconv_forward.1} parent=5 // pred_region
      %s117 = ssub.s32 %s9, 1
      // Predicated region
      $region13: #{upscale_dconv_forward.1} parent=11 // pred_check
        %p118 = pneg %p56
      $region14: #{upscale_dconv_forward.1} parent=11 // pred_check_branch
        %120 = sbr.rel (%p118) target = $region16
      $region15: #{upscale_dconv_forward.1} parent=11 // pred_region
        _
      $region16: #{upscale_dconv_forward.1} parent=11 // pred_fallthru
        _
      // Predicated region
      $region17: #{upscale_dconv_forward.1} parent=11 // pred_check
        %p121 = pneg %p77
      $region18: #{upscale_dconv_forward.1} parent=11 // pred_check_branch
        %123 = sbr.rel (%p121) target = $region20
      $region19: #{upscale_dconv_forward.1} parent=11 // pred_region
        _
      $region20: #{upscale_dconv_forward.1} parent=11 // pred_fallthru
        _
    $region12: #{upscale_dconv_forward.1} parent=5 // pred_fallthru
      _
    %p124 = scmp.lt.s32.totalorder %s9, 2
    // Predicated region
    $region21: #{upscale_dconv_forward.1} parent=5 // pred_check
      %p125 = pneg %p124
    $region22: #{upscale_dconv_forward.1} parent=5 // pred_check_branch
      %127 = sbr.rel (%p125) target = $region24
    $region23: #{upscale_dconv_forward.1} parent=5 // pred_region
      // Predicated region
      $region25: #{upscale_dconv_forward.1} parent=23 // pred_check
        %p128 = pneg %p29
      $region26: #{upscale_dconv_forward.1} parent=23 // pred_check_branch
        %130 = sbr.rel (%p128) target = $region28
      $region27: #{upscale_dconv_forward.1} parent=23 // pred_region
        %p131 = scmp.lt.s32.totalorder %s9, 1
        %s132 = scalar_select %p131, %s9, 1
        %s133 = smul.addr %s132, 3
        %s134 = smul.addr %s133, 2
        %s135 = scalar_lea.vmem %s0, %s134
      $region28: #{upscale_dconv_forward.1} parent=23 // pred_fallthru
        _
    $region24: #{upscale_dconv_forward.1} parent=5 // pred_fallthru
      _
    %p136 = scmp.le.s32.totalorder 1, %s9
    %p137 = scmp.lt.s32.totalorder %s9, 3
    %p138 = pnand %p136, %p137
    %p139 = pneg %p138
    // Predicated region
    $region29: #{upscale_dconv_forward.1} parent=5 // pred_check
      _
    $region30: #{upscale_dconv_forward.1} parent=5 // pred_check_branch
      %141 = sbr.rel (%p138) target = $region32
    $region31: #{upscale_dconv_forward.1} parent=5 // pred_region
      %s142 = ssub.s32 %s9, 1
      %p143 = scmp.lt.s32.totalorder %s14, 1
      %s144 = scalar_select %p143, %s14, 1
      %s145 = smul.addr %s144, 3
      %s146 = smul.addr %s145, 2
      %s147 = scalar_lea.vmem %s0, %s146
      %p148 = pneg %p35
      %p149 = pneg %p32
      %p150 = pneg %p56
      %p151 = pneg %p53
      %p152 = pneg %p77
      %p153 = pneg %p74
      %p154 = pneg %p103
      %p155 = pneg %p100
      %p156 = scmp.lt.s32.totalorder %s14, 1
      %s157 = scalar_select %p156, %s14, 1
      %s158 = smul.addr %s157, 8
      %s159 = smul.addr %s158, 8
      %s160 = scalar_lea.vmem %s3, %s159
      %p161 = scmp.lt.s32.totalorder %s14, 1
      %s162 = scalar_select %p161, %s14, 1
      %s163 = smul.addr %s162, 3
      %s164 = smul.addr %s163, 2
      %s165 = scalar_lea.vmem %s0, %s164
      %p166 = scmp.lt.s32.totalorder %s14, 1
      %s167 = scalar_select %p166, %s14, 1
      %s168 = smul.addr %s167, 8
      %s169 = smul.addr %s168, 8
      %s170 = scalar_lea.vmem %s3, %s169
      %v172 = vlaneseq
      %v173 = vand.u32 %v172, 127
      %v174 = vadd.s32 %v173, 128
      %vm175 = vcmp.lt.s32.totalorder %v173, 0
      %v176 = vsub.s32 0, %v173
      %v177 = vsel %vm175, %v176, %v173
      %v178 = vshrl.u32 %v177, 4
      %v179 = vand.u32 %v177, 15
      %v180 = vsub.s32 0, %v179
      %v181 = vsel %vm175, %v180, %v179
      %vm182 = vcmp.lt.s32.totalorder %v174, 0
      %v183 = vsub.s32 0, %v174
      %v184 = vsel %vm182, %v183, %v174
      %v185 = vshrl.u32 %v184, 4
      %v186 = vand.u32 %v184, 15
      %v187 = vsub.s32 0, %v186
      %v188 = vsel %vm182, %v187, %v186
      %vm189 = vcmp.ne.s32.totalorder %v181, 0
      %vm190 = vcmp.ne.s32.totalorder %v188, 0
      %vm191 = vcmp.lt.s32.totalorder %v181, 0
      %vm192 = vcmp.lt.s32.totalorder %v188, 0
      %vm193 = vmand %vm191, %vm189
      %vm194 = vmand %vm192, %vm190
      %v195 = vadd.s32 %v181, 16
      %v196 = vadd.s32 %v188, 16
      %v197 = vsel %vm193, %v195, %v181
      %v198 = vsel %vm194, %v196, %v188
      %vm199 = vcmp.lt.s32.totalorder %v197, 15
      %vm200 = vcmp.lt.s32.totalorder %v198, 15
      %v201 = vsel %vm199, 1, 0
      %v202 = vsel %vm200, 1, 0
      %v203 = vcvt.s32.f32 %v201
      %v204 = vcvt.s32.f32 %v202
      %vm205 = vcmp.lt.s32.totalorder %v173, 256
      %vm206 = vcmp.lt.s32.totalorder %v174, 256
      %v207 = vsel %vm205, 1, 0
      %v208 = vsel %vm206, 1, 0
      %v209 = vcvt.s32.f32 %v207
      %v210 = vcvt.s32.f32 %v208
      %vm211 = vcmp.lt.s32.totalorder %v173, 240
      %vm212 = vcmp.lt.s32.totalorder %v174, 240
      %v213 = vsel %vm211, 1, 0
      %v214 = vsel %vm212, 1, 0
      %v215 = vcvt.s32.f32 %v213
      %v216 = vcvt.s32.f32 %v214
      %v217 = vmul.f32 %v209, %v203
      %v218 = vmul.f32 %v210, %v204
      %v219 = vmul.f32 %v215, %v203
      %v220 = vmul.f32 %v216, %v204
      %v221 = vld [vmem:[%s2] sm:$0xff]
      %v222 = vld [vmem:[%s2 + $0x8] sm:$0xff]
      %v223 = vld [vmem:[%s2 + $0x10] sm:$0xff]
      %v224 = vld [vmem:[%s2 + $0x18] sm:$0xff]
      %v225 = vld [vmem:[%s165] sm:$0x3f]
      %v226 = vld [vmem:[%s1] sm:$0xf]
      %v227 = vld [vmem:[%s1 + $0x4] sm:$0xf]
      %v228 = vld [vmem:[%s1 + $0x8] sm:$0xf]
      %v229 = vld [vmem:[%s1 + $0xc] sm:$0xf]
      %s230 = scalar_lea.vmem %s1, 16
      %v231 = vld [vmem:[%s230] sm:$0xf]
      %v232 = vld [vmem:[%s230 + $0x4] sm:$0xf]
      %v233 = vld [vmem:[%s230 + $0x8] sm:$0xf]
      %v234 = vld [vmem:[%s230 + $0xc] sm:$0xf]
      %v239 = vunpack.c.l.b16 %v231
      %v240 = vunpack.c.l.b16 %v232
      %v241 = vunpack.c.l.b16 %v233
      %v242 = vunpack.c.l.b16 %v234
      %v243 = vpack.c.b16 %v240, %v239
      %v244 = vpack.c.b16 %v242, %v241
      %246 = vst [vmem:[#allocation1] ss:$4 sm:$0xff] %v225
      %v247 = vld.sshfl [vmem:[#allocation1] sm:$0xff pattern:$0x73625140]
      %v249 = vld.sshfl [vmem:[#allocation1 + $0x8] sm:$0xff pattern:$0x73625140]
      %v251 = vld.sshfl [vmem:[#allocation1 + $0x10] sm:$0xff pattern:$0x73625140]
      %253 = vrot.lane.b32.xlu0 %v247, 127
      %v254 = vpop.permute.xlu0 %253
      %255 = vrot.lane.b32.xlu0 %v249, 127
      %v256 = vpop.permute.xlu0 %255
      %257 = vrot.lane.b32.xlu0 %v251, 127
      %v258 = vpop.permute.xlu0 %257
      %vm259 = vcmask 1039360
      %v260 = vsel %vm259, %v254, %v256
      %v261 = vsel %vm259, %v256, %v258
      %vm262 = vcmask 31744
      %v264 = vsel %vm262, %v243, 0
      %v267 = vsel %vm262, %v244, 0
      %vm269 = vcmask 1041408
      %v271 = vsel %vm269, %v260, 0
      %v274 = vsel %vm269, %v261, 0
      %276 = vmatpush.bf16.msra.mxu0 0
      %277 = vmatpush.bf16.msra.mxu0 0
      %278 = vmatpush.bf16.msra.mxu0 0
      %279 = vmatpush.bf16.msra.mxu0 0
      %280 = vmatpush.bf16.msra.mxu0 0
      %281 = vmatpush.bf16.msra.mxu0 0
      %282 = vmatpush.bf16.msra.mxu0 0
      %283 = vmatpush.bf16.msra.mxu0 %v271
      %284 = vmatmul.bf16.gmra.mxu0 %v264
      %v285 = vpop.f32.mrf.mxu0
      %v286 = vadd.f32 0.0, %v285
      %v287 = vpop.f32.mrf.mxu0
      %v288 = vadd.f32 0.0, %v287
      %289 = vmatmul.bf16.gmra.mxu0 %v267
      %v290 = vpop.f32.mrf.mxu0
      %v291 = vadd.f32 0.0, %v290
      %v292 = vpop.f32.mrf.mxu0
      %v293 = vadd.f32 0.0, %v292
      %294 = vdwg.mxu0
      %295 = vmatpush.bf16.msra.mxu0 0
      %296 = vmatpush.bf16.msra.mxu0 0
      %297 = vmatpush.bf16.msra.mxu0 0
      %298 = vmatpush.bf16.msra.mxu0 0
      %299 = vmatpush.bf16.msra.mxu0 0
      %300 = vmatpush.bf16.msra.mxu0 0
      %301 = vmatpush.bf16.msra.mxu0 0
      %302 = vmatpush.bf16.msra.mxu0 %v274
      %303 = vmatmul.bf16.gmra.mxu0 %v264
      %v304 = vpop.f32.mrf.mxu0
      %v305 = vadd.f32 0.0, %v304
      %v306 = vpop.f32.mrf.mxu0
      %v307 = vadd.f32 0.0, %v306
      %308 = vmatmul.bf16.gmra.mxu0 %v267
      %v309 = vpop.f32.mrf.mxu0
      %v310 = vadd.f32 0.0, %v309
      %v311 = vpop.f32.mrf.mxu0
      %v312 = vadd.f32 0.0, %v311
      %313 = vdwg.mxu0
      %v318 = vunpack.c.l.b16 %v226
      %v319 = vunpack.c.l.b16 %v227
      %v320 = vunpack.c.l.b16 %v228
      %v321 = vunpack.c.l.b16 %v229
      %v322 = vpack.c.b16 %v319, %v318
      %v323 = vpack.c.b16 %v321, %v320
      %324 = vst [vmem:[#allocation1] ss:$4 sm:$0xff] %v225
      %v325 = vld.sshfl [vmem:[#allocation1] sm:$0xff pattern:$0x73625140]
      %v326 = vld.sshfl [vmem:[#allocation1 + $0x8] sm:$0xff pattern:$0x73625140]
      %v328 = vsel %vm262, %v322, 0
      %v331 = vsel %vm262, %v323, 0
      %v333 = vsel %vm269, %v325, 0
      %v335 = vsel %vm269, %v326, 0
      %337 = vmatpush.bf16.msra.mxu0 0
      %338 = vmatpush.bf16.msra.mxu0 0
      %339 = vmatpush.bf16.msra.mxu0 0
      %340 = vmatpush.bf16.msra.mxu0 0
      %341 = vmatpush.bf16.msra.mxu0 0
      %342 = vmatpush.bf16.msra.mxu0 0
      %343 = vmatpush.bf16.msra.mxu0 0
      %344 = vmatpush.bf16.msra.mxu0 %v333
      %345 = vmatmul.bf16.gmra.mxu0 %v328
      %v346 = vpop.f32.mrf.mxu0
      %v347 = vadd.f32 %v286, %v346
      %v348 = vpop.f32.mrf.mxu0
      %v349 = vadd.f32 %v288, %v348
      %350 = vmatmul.bf16.gmra.mxu0 %v331
      %v351 = vpop.f32.mrf.mxu0
      %v352 = vadd.f32 %v291, %v351
      %v353 = vpop.f32.mrf.mxu0
      %v354 = vadd.f32 %v293, %v353
      %355 = vdwg.mxu0
      %356 = vmatpush.bf16.msra.mxu0 0
      %357 = vmatpush.bf16.msra.mxu0 0
      %358 = vmatpush.bf16.msra.mxu0 0
      %359 = vmatpush.bf16.msra.mxu0 0
      %360 = vmatpush.bf16.msra.mxu0 0
      %361 = vmatpush.bf16.msra.mxu0 0
      %362 = vmatpush.bf16.msra.mxu0 0
      %363 = vmatpush.bf16.msra.mxu0 %v335
      %364 = vmatmul.bf16.gmra.mxu0 %v328
      %v365 = vpop.f32.mrf.mxu0
      %v366 = vadd.f32 %v305, %v365
      %v367 = vpop.f32.mrf.mxu0
      %v368 = vadd.f32 %v307, %v367
      %369 = vmatmul.bf16.gmra.mxu0 %v331
      %v370 = vpop.f32.mrf.mxu0
      %v371 = vadd.f32 %v310, %v370
      %v372 = vpop.f32.mrf.mxu0
      %v373 = vadd.f32 %v312, %v372
      %374 = vdwg.mxu0
      %s375 = scalar_lea.vmem %s1, 32
      %v376 = vld [vmem:[%s375] sm:$0xf]
      %v377 = vld [vmem:[%s375 + $0x4] sm:$0xf]
      %v378 = vld [vmem:[%s375 + $0x8] sm:$0xf]
      %v379 = vld [vmem:[%s375 + $0xc] sm:$0xf]
      %v384 = vunpack.c.l.b16 %v376
      %v385 = vunpack.c.l.b16 %v377
      %v386 = vunpack.c.l.b16 %v378
      %v387 = vunpack.c.l.b16 %v379
      %v388 = vpack.c.b16 %v385, %v384
      %v389 = vpack.c.b16 %v387, %v386
      %390 = vst [vmem:[#allocation1] ss:$4 sm:$0xff] %v225
      %v391 = vld.sshfl [vmem:[#allocation1] sm:$0xff pattern:$0x73625140]
      %v393 = vld.sshfl [vmem:[#allocation1 + $0x8] sm:$0xff pattern:$0x73625140]
      %v395 = vld.sshfl [vmem:[#allocation1 + $0x10] sm:$0xff pattern:$0x73625140]
      %397 = vrot.lane.b32.xlu0 %v391, 112
      %v398 = vpop.permute.xlu0 %397
      %399 = vrot.lane.b32.xlu0 %v393, 112
      %v400 = vpop.permute.xlu0 %399
      %401 = vrot.lane.b32.xlu0 %v395, 112
      %v402 = vpop.permute.xlu0 %401
      %vm403 = vcmask 916480
      %v404 = vsel %vm403, %v398, %v400
      %v405 = vsel %vm403, %v400, %v402
      %v407 = vsel %vm262, %v388, 0
      %v410 = vsel %vm262, %v389, 0
      %v413 = vsel %vm269, %v404, 0
      %v416 = vsel %vm269, %v405, 0
      %418 = vmatpush.bf16.msra.mxu0 0
      %419 = vmatpush.bf16.msra.mxu0 0
      %420 = vmatpush.bf16.msra.mxu0 0
      %421 = vmatpush.bf16.msra.mxu0 0
      %422 = vmatpush.bf16.msra.mxu0 0
      %423 = vmatpush.bf16.msra.mxu0 0
      %424 = vmatpush.bf16.msra.mxu0 0
      %425 = vmatpush.bf16.msra.mxu0 %v413
      %426 = vmatmul.bf16.gmra.mxu0 %v407
      %v427 = vpop.f32.mrf.mxu0
      %v428 = vadd.f32 0.0, %v427
      %v429 = vpop.f32.mrf.mxu0
      %v430 = vadd.f32 0.0, %v429
      %431 = vmatmul.bf16.gmra.mxu0 %v410
      %v432 = vpop.f32.mrf.mxu0
      %v433 = vadd.f32 0.0, %v432
      %v434 = vpop.f32.mrf.mxu0
      %v435 = vadd.f32 0.0, %v434
      %436 = vdwg.mxu0
      %437 = vmatpush.bf16.msra.mxu0 0
      %438 = vmatpush.bf16.msra.mxu0 0
      %439 = vmatpush.bf16.msra.mxu0 0
      %440 = vmatpush.bf16.msra.mxu0 0
      %441 = vmatpush.bf16.msra.mxu0 0
      %442 = vmatpush.bf16.msra.mxu0 0
      %443 = vmatpush.bf16.msra.mxu0 0
      %444 = vmatpush.bf16.msra.mxu0 %v416
      %445 = vmatmul.bf16.gmra.mxu0 %v407
      %v446 = vpop.f32.mrf.mxu0
      %v447 = vadd.f32 0.0, %v446
      %v448 = vpop.f32.mrf.mxu0
      %v449 = vadd.f32 0.0, %v448
      %450 = vmatmul.bf16.gmra.mxu0 %v410
      %v451 = vpop.f32.mrf.mxu0
      %v452 = vadd.f32 0.0, %v451
      %v453 = vpop.f32.mrf.mxu0
      %v454 = vadd.f32 0.0, %v453
      %455 = vdwg.mxu0
      %v456 = vadd.f32 %v347, %v428
      %v457 = vadd.f32 %v366, %v447
      %v458 = vadd.f32 %v349, %v430
      %v459 = vadd.f32 %v368, %v449
      %v460 = vadd.f32 %v352, %v433
      %v461 = vadd.f32 %v371, %v452
      %v462 = vadd.f32 %v354, %v435
      %v463 = vadd.f32 %v373, %v454
      %s464 = scalar_lea.vmem %s1, 48
      %v465 = vld [vmem:[%s464] sm:$0xf]
      %v466 = vld [vmem:[%s464 + $0x4] sm:$0xf]
      %v467 = vld [vmem:[%s464 + $0x8] sm:$0xf]
      %v468 = vld [vmem:[%s464 + $0xc] sm:$0xf]
      %v473 = vunpack.c.l.b16 %v465
      %v474 = vunpack.c.l.b16 %v466
      %v475 = vunpack.c.l.b16 %v467
      %v476 = vunpack.c.l.b16 %v468
      %v477 = vpack.c.b16 %v474, %v473
      %v478 = vpack.c.b16 %v476, %v475
      %479 = vst [vmem:[#allocation1] ss:$4 sm:$0xff] %v225
      %v480 = vld.sshfl [vmem:[#allocation1] sm:$0xff pattern:$0x73625140]
      %v482 = vld.sshfl [vmem:[#allocation1 + $0x8] sm:$0xff pattern:$0x73625140]
      %v484 = vld.sshfl [vmem:[#allocation1 + $0x10] sm:$0xff pattern:$0x73625140]
      %486 = vrot.lane.b32.xlu0 %v480, 111
      %v487 = vpop.permute.xlu0 %486
      %488 = vrot.lane.b32.xlu0 %v482, 111
      %v489 = vpop.permute.xlu0 %488
      %490 = vrot.lane.b32.xlu0 %v484, 111
      %v491 = vpop.permute.xlu0 %490
      %vm492 = vcmask 908288
      %v493 = vsel %vm492, %v487, %v489
      %v494 = vsel %vm492, %v489, %v491
      %v496 = vsel %vm262, %v477, 0
      %v499 = vsel %vm262, %v478, 0
      %v502 = vsel %vm269, %v493, 0
      %v505 = vsel %vm269, %v494, 0
      %507 = vmatpush.bf16.msra.mxu0 0
      %508 = vmatpush.bf16.msra.mxu0 0
      %509 = vmatpush.bf16.msra.mxu0 0
      %510 = vmatpush.bf16.msra.mxu0 0
      %511 = vmatpush.bf16.msra.mxu0 0
      %512 = vmatpush.bf16.msra.mxu0 0
      %513 = vmatpush.bf16.msra.mxu0 0
      %514 = vmatpush.bf16.msra.mxu0 %v502
      %515 = vmatmul.bf16.gmra.mxu0 %v496
      %v516 = vpop.f32.mrf.mxu0
      %v517 = vadd.f32 0.0, %v516
      %v518 = vpop.f32.mrf.mxu0
      %v519 = vadd.f32 0.0, %v518
      %520 = vmatmul.bf16.gmra.mxu0 %v499
      %v521 = vpop.f32.mrf.mxu0
      %v522 = vadd.f32 0.0, %v521
      %v523 = vpop.f32.mrf.mxu0
      %v524 = vadd.f32 0.0, %v523
      %525 = vdwg.mxu0
      %526 = vmatpush.bf16.msra.mxu0 0
      %527 = vmatpush.bf16.msra.mxu0 0
      %528 = vmatpush.bf16.msra.mxu0 0
      %529 = vmatpush.bf16.msra.mxu0 0
      %530 = vmatpush.bf16.msra.mxu0 0
      %531 = vmatpush.bf16.msra.mxu0 0
      %532 = vmatpush.bf16.msra.mxu0 0
      %533 = vmatpush.bf16.msra.mxu0 %v505
      %534 = vmatmul.bf16.gmra.mxu0 %v496
      %v535 = vpop.f32.mrf.mxu0
      %v536 = vadd.f32 0.0, %v535
      %v537 = vpop.f32.mrf.mxu0
      %v538 = vadd.f32 0.0, %v537
      %539 = vmatmul.bf16.gmra.mxu0 %v499
      %v540 = vpop.f32.mrf.mxu0
      %v541 = vadd.f32 0.0, %v540
      %v542 = vpop.f32.mrf.mxu0
      %v543 = vadd.f32 0.0, %v542
      %544 = vdwg.mxu0
      %v545 = vadd.f32 %v456, %v517
      %v546 = vadd.f32 %v457, %v536
      %v547 = vadd.f32 %v458, %v519
      %v548 = vadd.f32 %v459, %v538
      %v549 = vadd.f32 %v460, %v522
      %v550 = vadd.f32 %v461, %v541
      %v551 = vadd.f32 %v462, %v524
      %v552 = vadd.f32 %v463, %v543
      %554 = vset.pattern.permute.xlu0 0
      %555 = vperm.xlu0 %554, %v221
      %v556 = vpop.permute.xlu0 %555
      %559 = vset.pattern.permute.xlu0 0
      %560 = vperm.xlu0 %559, %v222
      %v561 = vpop.permute.xlu0 %560
      %564 = vset.pattern.permute.xlu0 0
      %565 = vperm.xlu0 %564, %v223
      %v566 = vpop.permute.xlu0 %565
      %569 = vset.pattern.permute.xlu0 0
      %570 = vperm.xlu0 %569, %v224
      %v571 = vpop.permute.xlu0 %570
      %v573 = vadd.f32 %v545, %v556
      %v574 = vadd.f32 %v546, %v556
      %v575 = vadd.f32 %v547, %v561
      %v576 = vadd.f32 %v548, %v561
      %v577 = vadd.f32 %v549, %v566
      %v578 = vadd.f32 %v550, %v566
      %v579 = vadd.f32 %v551, %v571
      %v580 = vadd.f32 %v552, %v571
      %v581 = vperm.slane %v209, 0
      %v582 = vperm.slane %v210, 0
      %v583 = vperm.slane %v217, 0
      %v584 = vperm.slane %v218, 0
      %v585 = vperm.slane %v215, 0
      %v586 = vperm.slane %v216, 0
      %v587 = vperm.slane %v219, 0
      %v588 = vperm.slane %v220, 0
      %v589 = vmul.f32 %v573, %v581
      %v590 = vmul.f32 %v574, %v582
      %v591 = vmul.f32 %v575, %v583
      %v592 = vmul.f32 %v576, %v584
      %v593 = vmul.f32 %v577, %v585
      %v594 = vmul.f32 %v578, %v586
      %v595 = vmul.f32 %v579, %v587
      %v596 = vmul.f32 %v580, %v588
      %v597 = vadd.f32 %v589, %v590
      %v598 = vadd.f32 %v597, %v591
      %v599 = vadd.f32 %v598, %v592
      %v600 = vadd.f32 %v599, %v593
      %v601 = vadd.f32 %v600, %v594
      %v602 = vadd.f32 %v601, %v595
      %v603 = vadd.f32 %v602, %v596
      %604 = vadd.xlane.f32.xlu0 %v603
      %v605 = vpop.xlane.xlu0 %604
      %v606 = vmul.f32 %v589, %v589
      %v607 = vmul.f32 %v590, %v590
      %v608 = vmul.f32 %v591, %v591
      %v609 = vmul.f32 %v592, %v592
      %v610 = vmul.f32 %v593, %v593
      %v611 = vmul.f32 %v594, %v594
      %v612 = vmul.f32 %v595, %v595
      %v613 = vmul.f32 %v596, %v596
      %v614 = vadd.f32 %v606, %v607
      %v615 = vadd.f32 %v614, %v608
      %v616 = vadd.f32 %v615, %v609
      %v617 = vadd.f32 %v616, %v610
      %v618 = vadd.f32 %v617, %v611
      %v619 = vadd.f32 %v618, %v612
      %v620 = vadd.f32 %v619, %v613
      %621 = vadd.xlane.f32.xlu0 %v620
      %v622 = vpop.xlane.xlu0 %621
      %v623 = vmul.f32 %v605, 0.0010405828
      %v624 = vmul.f32 %v622, 0.0010405828
      %v625 = vmul.f32 %v623, %v623
      %v626 = vsub.f32 %v624, %v625
      %v627 = vmax.f32 %v626, 0.0
      %v628 = vsub.f32 %v573, %v623
      %v629 = vsub.f32 %v574, %v623
      %v630 = vsub.f32 %v575, %v623
      %v631 = vsub.f32 %v576, %v623
      %v632 = vsub.f32 %v577, %v623
      %v633 = vsub.f32 %v578, %v623
      %v634 = vsub.f32 %v579, %v623
      %v635 = vsub.f32 %v580, %v623
      %v636 = vadd.f32 %v627, 1e-05
      %v637 = vrsqrt.pop %v636
      %v638 = vmul.f32 %v637, %v636
      %v639 = vmul.f32 %v638, %v637
      %v640 = vmul.f32 0.5, %v639
      %v641 = vsub.f32 1.5, %v640
      %v642 = vmul.f32 %v637, %v641
      %vm643 = vweird.f32 %v636
      %vm644 = vweird.f32 %v637
      %vm645 = vmor %vm643, %vm644
      %v646 = vsel %vm645, %v637, %v642
      %v647 = vmul.f32 %v628, %v646
      %v648 = vmul.f32 %v629, %v646
      %v649 = vmul.f32 %v630, %v646
      %v650 = vmul.f32 %v631, %v646
      %v651 = vmul.f32 %v632, %v646
      %v652 = vmul.f32 %v633, %v646
      %v653 = vmul.f32 %v634, %v646
      %v654 = vmul.f32 %v635, %v646
      %655 = vst [vmem:[%s170] sm:$0xff] %v647
      %656 = vst [vmem:[%s170 + $0x8] sm:$0xff] %v648
      %657 = vst [vmem:[%s170 + $0x10] sm:$0xff] %v649
      %658 = vst [vmem:[%s170 + $0x18] sm:$0xff] %v650
      %659 = vst [vmem:[%s170 + $0x20] sm:$0xff] %v651
      %660 = vst [vmem:[%s170 + $0x28] sm:$0xff] %v652
      %661 = vst [vmem:[%s170 + $0x30] sm:$0xff] %v653
      %662 = vst [vmem:[%s170 + $0x38] sm:$0xff] %v654
      %p663 = scmp.lt.s32.totalorder %s14, 1
      %s664 = scalar_select %p663, %s14, 1
      %s665 = smul.addr %s664, 8
      %s666 = smul.addr %s665, 8
      %s667 = scalar_lea.vmem %s3, %s666
      // Predicated region
      $region33: #{upscale_dconv_forward.1} parent=31 // pred_check
        %p668 = pneg %p100
      $region34: #{upscale_dconv_forward.1} parent=31 // pred_check_branch
        %670 = sbr.rel (%p668) target = $region36
      $region35: #{upscale_dconv_forward.1} parent=31 // pred_region
        _
      $region36: #{upscale_dconv_forward.1} parent=31 // pred_fallthru
        _
    $region32: #{upscale_dconv_forward.1} parent=5 // pred_fallthru
      _
    %p671 = scmp.le.s32.totalorder 2, %s9
    // Predicated region
    $region37: #{upscale_dconv_forward.1} parent=5 // pred_check
      %p672 = pneg %p671
    $region38: #{upscale_dconv_forward.1} parent=5 // pred_check_branch
      %674 = sbr.rel (%p672) target = $region40
    $region39: #{upscale_dconv_forward.1} parent=5 // pred_region
      %s675 = ssub.s32 %s9, 2
      // Predicated region
      $region41: #{upscale_dconv_forward.1} parent=39 // pred_check
        %p676 = pneg %p106
      $region42: #{upscale_dconv_forward.1} parent=39 // pred_check_branch
        %678 = sbr.rel (%p676) target = $region44
      $region43: #{upscale_dconv_forward.1} parent=39 // pred_region
        %p679 = scmp.lt.s32.totalorder %s15, 1
        %s680 = scalar_select %p679, %s15, 1
        %s681 = smul.addr %s680, 8
        %s682 = smul.addr %s681, 8
        %s683 = scalar_lea.vmem %s3, %s682
      $region44: #{upscale_dconv_forward.1} parent=39 // pred_fallthru
        _
    $region40: #{upscale_dconv_forward.1} parent=5 // pred_fallthru
      _
  $region6: #{upscale_dconv_forward.1} parent=0 // loop_footer
    %s13 = sadd.s32 1, %s9
  $region7: #{upscale_dconv_forward.1} parent=0 // loop_footer_branch
    %8 = sbr.rel target = $region3
  $region8: #{upscale_dconv_forward.1} parent=0 // loop_exit
    _

</llo_original>
